<compile_context>
chip_gen: v5e
topology: v5e:2x2
jax: 0.10.0
libtpu: 0.0.40
codegen_flags: <defaults>
</compile_context>

<pallas_src>
import math

import jax
import jax.numpy as jnp
from jax.experimental import pallas as pl
from jax.experimental.pallas import tpu as pltpu

# rho value whose softplus is exactly 1.0 -> zero KL contribution for padding.
_RHO_PAD = float(math.log(math.e - 1.0))
_TARGET_TILE_BYTES = 2 * 1024 * 1024  # ~2 MiB f32 per weight-family tile (v7x-safe)


def _round_up(v, m):
    return (v + m - 1) // m * m


def _hbl_kernel(x_ref, mask_ref, wmu_ref, wrho_ref, epsw_ref,
                bmu_ref, brho_ref, epsb_ref, y_ref, kl_ref):
    # Load every ref exactly once (Mosaic does not reliably CSE repeated loads).
    wmu = wmu_ref[...]          # (IN_pad, TILE_N)
    wrho = wrho_ref[...]        # (IN_pad, TILE_N)
    epsw = epsw_ref[...]        # (IN_pad, TILE_N)
    bmu = bmu_ref[...]          # (1, TILE_N)
    brho = brho_ref[...]        # (1, TILE_N)
    epsb = epsb_ref[...]        # (1, TILE_N)

    # softplus -> sigma (one exp + one log1p per element on the EUP); sigma is
    # reused for both the sample and the KL.
    w_sigma = jnp.log1p(jnp.exp(wrho))
    b_sigma = jnp.log1p(jnp.exp(brho))

    # Reparameterized sample; weights already (IN, TILE_N), MXU-ready.
    w = wmu + w_sigma * epsw
    b = bmu + b_sigma * epsb

    # Dropout (mask holds 0 or 1/(1-p)) + linear.
    xd = x_ref[...] * mask_ref[...]                       # (B_pad, IN_pad)
    y = jnp.dot(xd, w, preferred_element_type=jnp.float32)
    y_ref[...] = (y + b).astype(y_ref.dtype)

    # KL vs NormalPrior(mu=0, logvar=0); "-0.5" per element hoisted out of the
    # reduction (padded elements contribute sigma=1, mu=0 -> exactly 0).
    kl_w = jnp.sum(0.5 * (w_sigma * w_sigma + wmu * wmu) - jnp.log(w_sigma))
    kl_b = jnp.sum(0.5 * (b_sigma * b_sigma + bmu * bmu) - jnp.log(b_sigma))
    n_el = wmu.shape[0] * wmu.shape[1] + bmu.shape[1]
    kl_part = kl_w + kl_b - 0.5 * n_el

    # Per-tile partial into a lane-dense (1,128) block; wrapper reduces.
    kl_ref[...] = jnp.full((1, 128), kl_part, dtype=jnp.float32)


def hierarchical_bayesian_linear(x, mask, weight_mu, weight_rho,
                                 bias_mu, bias_rho, eps_w, eps_b, *, tile_n=None):
    """Returns (y, kl). Shapes: x,mask (B,IN); weight_* , eps_w (OUT,IN); bias_*, eps_b (OUT,)."""
    B, IN = x.shape
    OUT = weight_mu.shape[0]

    B_pad = _round_up(B, 8)
    IN_pad = _round_up(IN, 128)

    if tile_n is None:
        tile_n = max(128, (_TARGET_TILE_BYTES // (4 * IN_pad)) // 128 * 128)
    tile_n = max(128, (tile_n // 128) * 128)
    tile_n = min(tile_n, _round_up(OUT, 128))
    OUT_pad = _round_up(OUT, tile_n)
    n_tiles = OUT_pad // tile_n

    def pad2(a, rows, cols, val=0.0):
        return jnp.pad(a, ((0, rows - a.shape[0]), (0, cols - a.shape[1])),
                       constant_values=val)

    # Inputs: x/mask zero-padded; weight family pre-transposed to (IN, OUT) so
    # the in-kernel matmul needs no XLU transpose; pads chosen so they are
    # exactly KL- and matmul-neutral (mu=0, eps=0, rho=log(e-1) => sigma=1).
    x_p = pad2(x, B_pad, IN_pad)
    mask_p = pad2(mask, B_pad, IN_pad)
    wmu_t = pad2(weight_mu.T, IN_pad, OUT_pad)
    wrho_t = pad2(weight_rho.T, IN_pad, OUT_pad, _RHO_PAD)
    epsw_t = pad2(eps_w.T, IN_pad, OUT_pad)
    bmu_p = pad2(bias_mu.reshape(1, OUT), 1, OUT_pad)
    brho_p = pad2(bias_rho.reshape(1, OUT), 1, OUT_pad, _RHO_PAD)
    epsb_p = pad2(eps_b.reshape(1, OUT), 1, OUT_pad)

    x_map = lambda j: (0, 0)       # resident across OUT tiles (not re-fetched)
    w_map = lambda j: (0, j)
    b_map = lambda j: (0, j)

    y_p, kl_parts = pl.pallas_call(
        _hbl_kernel,
        grid=(n_tiles,),
        in_specs=[
            pl.BlockSpec((B_pad, IN_pad), x_map),
            pl.BlockSpec((B_pad, IN_pad), x_map),
            pl.BlockSpec((IN_pad, tile_n), w_map),
            pl.BlockSpec((IN_pad, tile_n), w_map),
            pl.BlockSpec((IN_pad, tile_n), w_map),
            pl.BlockSpec((1, tile_n), b_map),
            pl.BlockSpec((1, tile_n), b_map),
            pl.BlockSpec((1, tile_n), b_map),
        ],
        out_specs=(
            pl.BlockSpec((B_pad, tile_n), lambda j: (0, j)),
            pl.BlockSpec((1, 128), lambda j: (0, j)),
        ),
        out_shape=(
            jax.ShapeDtypeStruct((B_pad, OUT_pad), jnp.float32),
            jax.ShapeDtypeStruct((1, 128 * n_tiles), jnp.float32),
        ),
        compiler_params=pltpu.CompilerParams(
            dimension_semantics=("parallel",),           # v7x: 2 TCs split OUT tiles
            vmem_limit_bytes=32 * 1024 * 1024),
    )(x_p, mask_p, wmu_t, wrho_t, epsw_t, bmu_p, brho_p, epsb_p)

    y = y_p[:B, :OUT]
    kl = jnp.sum(kl_parts[0].reshape(n_tiles, 128)[:, 0])
    return y, kl


def init_params(key, in_features, out_features):
    # Matches reset_parameters():
    #   kaiming_uniform_(weight_mu, a=sqrt(5)) -> U(-1/sqrt(fan_in), 1/sqrt(fan_in))
    #   weight_rho = -5.0 ; bias_mu ~ U(-0.1, 0.1) ; bias_rho = -5.0
    k_w, k_b = jax.random.split(key)
    bound = 1.0 / jnp.sqrt(jnp.float32(in_features))
    weight_mu = jax.random.uniform(k_w, (out_features, in_features),
                                   jnp.float32, -bound, bound)
    weight_rho = jnp.full((out_features, in_features), -5.0, jnp.float32)
    bias_mu = jax.random.uniform(k_b, (out_features,), jnp.float32, -0.1, 0.1)
    bias_rho = jnp.full((out_features,), -5.0, jnp.float32)
    return weight_mu, weight_rho, bias_mu, bias_rho


def _reference(x, mask, weight_mu, weight_rho, bias_mu, bias_rho, eps_w, eps_b):
    w_sigma = jnp.log1p(jnp.exp(weight_rho))
    b_sigma = jnp.log1p(jnp.exp(bias_rho))
    w = weight_mu + w_sigma * eps_w
    b = bias_mu + b_sigma * eps_b
    y = (x * mask) @ w.T + b
    kl = (jnp.sum(-jnp.log(w_sigma) + 0.5 * (w_sigma**2 + weight_mu**2) - 0.5)
          + jnp.sum(-jnp.log(b_sigma) + 0.5 * (b_sigma**2 + bias_mu**2) - 0.5))
    return y, kl


if __name__ == "__main__":
    # Intentionally unaligned small shapes to exercise padding + multi-tile grid.
    B, IN, OUT = 4, 96, 200
    dropout_rate = 0.1

    key = jax.random.PRNGKey(0)
    k_param, k_epsw, k_epsb, k_drop, k_x = jax.random.split(key, 5)

    weight_mu, weight_rho, bias_mu, bias_rho = init_params(k_param, IN, OUT)

    x = jax.random.normal(k_x, (B, IN), jnp.float32)
    # reparameterization noise (torch.randn_like equivalents)
    eps_w = jax.random.normal(k_epsw, (OUT, IN), jnp.float32)
    eps_b = jax.random.normal(k_epsb, (OUT,), jnp.float32)
    # training-mode dropout mask: 0 with prob p, else 1/(1-p)
    keep = jax.random.bernoulli(k_drop, 1.0 - dropout_rate, (B, IN))
    mask = keep.astype(jnp.float32) / (1.0 - dropout_rate)

    y_ref, kl_ref = _reference(x, mask, weight_mu, weight_rho,
                               bias_mu, bias_rho, eps_w, eps_b)

    # 1) forced 128-wide OUT tiles -> 2-step grid (tiled path)
    y, kl = hierarchical_bayesian_linear(x, mask, weight_mu, weight_rho,
                                         bias_mu, bias_rho, eps_w, eps_b,
                                         tile_n=128)
    jax.block_until_ready((y, kl))
    assert y.shape == (B, OUT)
    assert jnp.allclose(y, y_ref, atol=1e-4, rtol=1e-4)
    assert jnp.allclose(kl, kl_ref, atol=1e-2, rtol=1e-4)

    # 2) auto tile size (single-tile path)
    y2, kl2 = hierarchical_bayesian_linear(x, mask, weight_mu, weight_rho,
                                           bias_mu, bias_rho, eps_w, eps_b)
    jax.block_until_ready((y2, kl2))
    assert jnp.allclose(y2, y_ref, atol=1e-4, rtol=1e-4)
    assert jnp.allclose(kl2, kl_ref, atol=1e-2, rtol=1e-4)

    print("KERNEL_OK")
</pallas_src>

<mosaic_0001>
module attributes {stable_mosaic.version = 11 : i64} {
  func.func @_hbl_kernel(%arg0: i32, %arg1: memref<8x128xf32, #tpu.memory_space<vmem>>, %arg2: memref<8x128xf32, #tpu.memory_space<vmem>>, %arg3: memref<128x128xf32, #tpu.memory_space<vmem>>, %arg4: memref<128x128xf32, #tpu.memory_space<vmem>>, %arg5: memref<128x128xf32, #tpu.memory_space<vmem>>, %arg6: memref<1x128xf32, #tpu.memory_space<vmem>>, %arg7: memref<1x128xf32, #tpu.memory_space<vmem>>, %arg8: memref<1x128xf32, #tpu.memory_space<vmem>>, %arg9: memref<8x128xf32, #tpu.memory_space<vmem>>, %arg10: memref<1x128xf32, #tpu.memory_space<vmem>>) attributes {dimension_semantics = [#tpu.dimension_semantics<parallel>], iteration_bounds = array<i64: 2>, scalar_prefetch = 0 : i64, scratch_operands = 0 : i64, tpu.core_type = #tpu.core_type<tc>, window_params = [{pipeline_mode = #tpu.pipeline_mode<synchronous>, transform_indices = @transform_0, window_bounds = array<i64: 8, 128>}, {pipeline_mode = #tpu.pipeline_mode<synchronous>, transform_indices = @transform_1, window_bounds = array<i64: 8, 128>}, {transform_indices = @transform_2, window_bounds = array<i64: 128, 128>}, {transform_indices = @transform_3, window_bounds = array<i64: 128, 128>}, {transform_indices = @transform_4, window_bounds = array<i64: 128, 128>}, {transform_indices = @transform_5, window_bounds = array<i64: 1, 128>}, {transform_indices = @transform_6, window_bounds = array<i64: 1, 128>}, {transform_indices = @transform_7, window_bounds = array<i64: 1, 128>}, {transform_indices = @transform_8, window_bounds = array<i64: 8, 128>}, {transform_indices = @transform_9, window_bounds = array<i64: 1, 128>}]} {
    %c0 = arith.constant 0 : index
    %c0_0 = arith.constant 0 : index
    %0 = vector.load %arg3[%c0, %c0_0] : memref<128x128xf32, #tpu.memory_space<vmem>>, vector<128x128xf32>
    %c0_1 = arith.constant 0 : index
    %c0_2 = arith.constant 0 : index
    %1 = vector.load %arg4[%c0_1, %c0_2] : memref<128x128xf32, #tpu.memory_space<vmem>>, vector<128x128xf32>
    %c0_3 = arith.constant 0 : index
    %c0_4 = arith.constant 0 : index
    %2 = vector.load %arg5[%c0_3, %c0_4] : memref<128x128xf32, #tpu.memory_space<vmem>>, vector<128x128xf32>
    %c0_5 = arith.constant 0 : index
    %c0_6 = arith.constant 0 : index
    %3 = vector.load %arg6[%c0_5, %c0_6] : memref<1x128xf32, #tpu.memory_space<vmem>>, vector<1x128xf32>
    %c0_7 = arith.constant 0 : index
    %c0_8 = arith.constant 0 : index
    %4 = vector.load %arg7[%c0_7, %c0_8] : memref<1x128xf32, #tpu.memory_space<vmem>>, vector<1x128xf32>
    %c0_9 = arith.constant 0 : index
    %c0_10 = arith.constant 0 : index
    %5 = vector.load %arg8[%c0_9, %c0_10] : memref<1x128xf32, #tpu.memory_space<vmem>>, vector<1x128xf32>
    %6 = math.exp %1 : vector<128x128xf32>
    %7 = math.log1p %6 : vector<128x128xf32>
    %8 = math.exp %4 : vector<1x128xf32>
    %9 = math.log1p %8 : vector<1x128xf32>
    %10 = arith.mulf %7, %2 : vector<128x128xf32>
    %11 = arith.addf %0, %10 : vector<128x128xf32>
    %12 = arith.mulf %9, %5 : vector<1x128xf32>
    %13 = arith.addf %3, %12 : vector<1x128xf32>
    %c0_11 = arith.constant 0 : index
    %c0_12 = arith.constant 0 : index
    %14 = vector.load %arg1[%c0_11, %c0_12] : memref<8x128xf32, #tpu.memory_space<vmem>>, vector<8x128xf32>
    %c0_13 = arith.constant 0 : index
    %c0_14 = arith.constant 0 : index
    %15 = vector.load %arg2[%c0_13, %c0_14] : memref<8x128xf32, #tpu.memory_space<vmem>>, vector<8x128xf32>
    %16 = arith.mulf %14, %15 : vector<8x128xf32>
    %cst = arith.constant dense<0.000000e+00> : vector<8x128xf32>
    %17 = tpu.matmul %16, %11, %cst {dimension_numbers = #tpu.dot_dimension_numbers<[1], [0], [0], [1], [0, 0, 1, 1], [], []>} : vector<8x128xf32>, vector<128x128xf32>, vector<8x128xf32> -> vector<8x128xf32>
    %18 = vector.broadcast %13 : vector<1x128xf32> to vector<8x128xf32>
    %19 = arith.addf %17, %18 : vector<8x128xf32>
    %c0_15 = arith.constant 0 : index
    %c0_16 = arith.constant 0 : index
    %20 = vector.load %arg9[%c0_15, %c0_16] : memref<8x128xf32, #tpu.memory_space<vmem>>, vector<8x128xf32>
    tpu.vector_store %arg9[%c0_15, %c0_16], %19 {strides = array<i32>} : memref<8x128xf32, #tpu.memory_space<vmem>>, vector<8x128xf32>,
    %21 = arith.mulf %7, %7 : vector<128x128xf32>
    %22 = arith.mulf %0, %0 : vector<128x128xf32>
    %23 = arith.addf %21, %22 : vector<128x128xf32>
    %cst_17 = arith.constant 5.000000e-01 : f32
    %24 = vector.broadcast %cst_17 : f32 to vector<128x128xf32>
    %25 = arith.mulf %24, %23 : vector<128x128xf32>
    %26 = math.log %7 : vector<128x128xf32>
    %27 = arith.subf %25, %26 : vector<128x128xf32>
    %28 = vector.shape_cast %27 : vector<128x128xf32> to vector<1x128x128xf32>
    %cst_18 = arith.constant dense<0.000000e+00> : vector<1xf32>
    %29 = vector.multi_reduction <add>, %28, %cst_18 [1, 2] : vector<1x128x128xf32> to vector<1xf32>
    %30 = vector.shape_cast %29 : vector<1xf32> to vector<1x1x1xf32>
    %31 = vector.extract %30[0, 0, 0] : f32 from vector<1x1x1xf32>
    %32 = arith.mulf %9, %9 : vector<1x128xf32>
    %33 = arith.mulf %3, %3 : vector<1x128xf32>
    %34 = arith.addf %32, %33 : vector<1x128xf32>
    %cst_19 = arith.constant 5.000000e-01 : f32
    %35 = vector.broadcast %cst_19 : f32 to vector<1x128xf32>
    %36 = arith.mulf %35, %34 : vector<1x128xf32>
    %37 = math.log %9 : vector<1x128xf32>
    %38 = arith.subf %36, %37 : vector<1x128xf32>
    %39 = vector.shape_cast %38 : vector<1x128xf32> to vector<1x1x128xf32>
    %cst_20 = arith.constant dense<0.000000e+00> : vector<1xf32>
    %40 = vector.multi_reduction <add>, %39, %cst_20 [1, 2] : vector<1x1x128xf32> to vector<1xf32>
    %41 = vector.shape_cast %40 : vector<1xf32> to vector<1x1x1xf32>
    %42 = vector.extract %41[0, 0, 0] : f32 from vector<1x1x1xf32>
    %43 = arith.addf %31, %42 : f32
    %cst_21 = arith.constant 8.256000e+03 : f32
    %44 = arith.subf %43, %cst_21 : f32
    %45 = vector.broadcast %44 : f32 to vector<1x128xf32>
    %c0_22 = arith.constant 0 : index
    %c0_23 = arith.constant 0 : index
    %46 = vector.load %arg10[%c0_22, %c0_23] : memref<1x128xf32, #tpu.memory_space<vmem>>, vector<1x128xf32>
    tpu.vector_store %arg10[%c0_22, %c0_23], %45 {strides = array<i32>} : memref<1x128xf32, #tpu.memory_space<vmem>>, vector<1x128xf32>,
    return
  }
  func.func @transform_0(%arg0: i32) -> (i32, i32) {
    %c0_i32 = arith.constant 0 : i32
    %c0_i32_0 = arith.constant 0 : i32
    %c0_i32_1 = arith.constant 0 : i32
    return %c0_i32, %c0_i32_0 : i32, i32
  }
  func.func @transform_1(%arg0: i32) -> (i32, i32) {
    %c0_i32 = arith.constant 0 : i32
    %c0_i32_0 = arith.constant 0 : i32
    %c0_i32_1 = arith.constant 0 : i32
    return %c0_i32, %c0_i32_0 : i32, i32
  }
  func.func @transform_2(%arg0: i32) -> (i32, i32) {
    %c0_i32 = arith.constant 0 : i32
    %c0_i32_0 = arith.constant 0 : i32
    return %c0_i32, %arg0 : i32, i32
  }
  func.func @transform_3(%arg0: i32) -> (i32, i32) {
    %c0_i32 = arith.constant 0 : i32
    %c0_i32_0 = arith.constant 0 : i32
    return %c0_i32, %arg0 : i32, i32
  }
  func.func @transform_4(%arg0: i32) -> (i32, i32) {
    %c0_i32 = arith.constant 0 : i32
    %c0_i32_0 = arith.constant 0 : i32
    return %c0_i32, %arg0 : i32, i32
  }
  func.func @transform_5(%arg0: i32) -> (i32, i32) {
    %c0_i32 = arith.constant 0 : i32
    %c0_i32_0 = arith.constant 0 : i32
    return %c0_i32, %arg0 : i32, i32
  }
  func.func @transform_6(%arg0: i32) -> (i32, i32) {
    %c0_i32 = arith.constant 0 : i32
    %c0_i32_0 = arith.constant 0 : i32
    return %c0_i32, %arg0 : i32, i32
  }
  func.func @transform_7(%arg0: i32) -> (i32, i32) {
    %c0_i32 = arith.constant 0 : i32
    %c0_i32_0 = arith.constant 0 : i32
    return %c0_i32, %arg0 : i32, i32
  }
  func.func @transform_8(%arg0: i32) -> (i32, i32) {
    %c0_i32 = arith.constant 0 : i32
    %c0_i32_0 = arith.constant 0 : i32
    return %c0_i32, %arg0 : i32, i32
  }
  func.func @transform_9(%arg0: i32) -> (i32, i32) {
    %c0_i32 = arith.constant 0 : i32
    %c0_i32_0 = arith.constant 0 : i32
    return %c0_i32, %arg0 : i32, i32
  }
}

</mosaic_0001>

<llo_original>
// kernel: tpu_custom_call.1
$region0: #{tpu_custom_call.1}
  #allocation0 [shape = 'u32[]', space=smem, size = 0x4, offset = 0x4, fixed_abs, tag = 'smem constant byte address 0x4 - core index']
  #allocation1 [shape = 'u32[72,128]{1,0:T(1,128)}', space=vmem, size = 0x9000, scoped, tag = 'internal scratch']
  %s0 = inlined_call_operand.hbm [shape: f32[8,128], index: 0, kind: input, shape index: {}]
  %s1 = inlined_call_operand.hbm [shape: f32[8,128], index: 1, kind: input, shape index: {}]
  %s2 = inlined_call_operand.hbm [shape: f32[128,256], index: 2, kind: input, shape index: {}]
  %s3 = inlined_call_operand.hbm [shape: f32[128,256], index: 3, kind: input, shape index: {}]
  %s4 = inlined_call_operand.hbm [shape: f32[128,256], index: 4, kind: input, shape index: {}]
  %s5 = inlined_call_operand.vmem [shape: f32[1,256], index: 5, kind: input, shape index: {}]
  %s6 = inlined_call_operand.vmem [shape: f32[1,256], index: 6, kind: input, shape index: {}]
  %s7 = inlined_call_operand.vmem [shape: f32[1,256], index: 7, kind: input, shape index: {}]
  %s8 = inlined_call_operand.hbm [shape: f32[8,256], index: 8, kind: output, shape index: {0}]
  %s9 = inlined_call_operand.hbm [shape: f32[1,256], index: 9, kind: output, shape index: {1}]
  %10 = xla_tuple %s8, %s9
  %s11 = sld [smem:[#allocation0]]
  $region93: #{tpu_custom_call.1} parent=0
    _
  %s13 = ssub.s32 1, %s11
  %s14 = scalar_select 0, %s13, %s11
  $region1: #{tpu_custom_call.1} parent=0
    #allocation2 [shape = 'u8[4096]{0}', space=vmem, size = 0x1000, scoped, tag = 'input window, operand 0, single buffered']
    #allocation3 [shape = 's32[2]{0}', space=sflag, size = 0x8, scoped, tag = 'scoped memory for tpu_custom_call.1']
    #allocation4 [shape = 's32[2]{0}', space=sflag, size = 0x8, scoped, tag = 'scoped memory for tpu_custom_call.1']
    #allocation5 [shape = 'u8[4096]{0}', space=vmem, size = 0x1000, scoped, tag = 'input window, operand 1, single buffered']
    #allocation6 [shape = 's32[1]{0}', space=sflag, size = 0x4, scoped, tag = 'scoped memory for tpu_custom_call.1']
    #allocation7 [shape = 'u8[131072]{0}', space=vmem, size = 0x20000, scoped, tag = 'input window, operand 2']
    #allocation8 [shape = 'u8[131072]{0}', space=vmem, size = 0x20000, scoped, tag = 'input window, operand 3']
    #allocation9 [shape = 'u8[131072]{0}', space=vmem, size = 0x20000, scoped, tag = 'input window, operand 4']
    #allocation10 [shape = 'u8[8192]{0}', space=vmem, size = 0x2000, scoped, tag = 'output window, operand 0']
    #allocation11 [shape = 'u8[1024]{0}', space=vmem, size = 0x400, scoped, tag = 'output window, operand 1']
    #allocation12 [shape = 's32[2]{0}', space=sflag, size = 0x8, scoped, tag = 'scoped memory for tpu_custom_call.1']
    %15 = vsyncpa [#allocation3], 0
    %16 = vsyncpa [#allocation6], 0
    %17 = vsyncpa [#allocation4], 0
    %s18 = scalar_lea.sflag [#allocation4], 1
    %19 = vsyncpa %s18, 0
    %20 = vsyncpa [#allocation12], 0
    %s21 = scalar_lea.sflag [#allocation12], 1
    %22 = vsyncpa %s21, 0
    loop: start=0, step=1, limit=4
    $region2: #{tpu_custom_call.1} parent=1 // loop_pre_header
      _
    $region3: #{tpu_custom_call.1} parent=1 // loop_header
      %s24 = sphi 0, %s28
      %p25 = scmp.ge.s32.totalorder %s24, 4
      %s32 = sphi 0, %s32
      %s34 = sphi 0, %s32
      %s35 = sphi 0, %s34
      %s49 = sphi 0, %s35
      %s53 = sphi 0, %s53
      %s55 = sphi 0, %s53
      %s56 = sphi 0, %s55
      %s70 = sphi 0, %s56
      %s76 = sphi 0, %s78
      %s79 = sphi 0, %s76
      %s80 = sphi 0, %s79
      %s96 = sphi 0, %s80
      %s102 = sphi 0, %s104
      %s105 = sphi 0, %s102
      %s106 = sphi 0, %s105
      %s122 = sphi 0, %s106
      %s128 = sphi 0, %s130
      %s131 = sphi 0, %s128
      %s132 = sphi 0, %s131
      %s148 = sphi 0, %s132
      %s154 = sphi 0, %s156
      %s157 = sphi 0, %s154
      %s158 = sphi 0, %s157
      %s174 = sphi 0, %s158
      %s180 = sphi 0, %s182
      %s183 = sphi 0, %s180
      %s184 = sphi 0, %s183
      %s200 = sphi 0, %s184
      %s206 = sphi 0, %s208
      %s209 = sphi 0, %s206
      %s210 = sphi 0, %s209
      %s226 = sphi 0, %s210
      %s232 = sphi 0, %s234
      %s235 = sphi 0, %s232
      %s236 = sphi 0, %s235
      %s252 = sphi 0, %s236
      %s258 = sphi 0, %s260
      %s261 = sphi 0, %s258
      %s262 = sphi 0, %s261
      %s278 = sphi 0, %s262
    $region4: #{tpu_custom_call.1} parent=1 // loop_header_branch
      %27 = sbr.rel (%p25) target = $region8
    $region5: #{tpu_custom_call.1} parent=1 // loop_body
      %s29 = ssub.s32 %s24, 1
      %s30 = ssub.s32 %s24, 2
      %s31 = sadd.s32 %s24, 1
      %s33 = sadd.s32 %s32, 1
      %p36 = scmp.eq.s32.totalorder %s24, 1
      %p37 = scmp.ne.s32.totalorder %s32, %s34
      %p38 = scmp.eq.s32.totalorder %s24, 0
      %p39 = por %p37, %p38
      %p40 = scmp.ne.s32.totalorder %s32, %s34
      %p41 = scmp.eq.s32.totalorder %s29, 1
      %p42 = por %p40, %p41
      %p43 = scmp.ne.s32.totalorder %s34, %s35
      %p44 = scmp.eq.s32.totalorder %s29, 0
      %p45 = por %p43, %p44
      %p46 = scmp.ne.s32.totalorder %s34, %s35
      %p47 = scmp.eq.s32.totalorder %s30, 1
      %p48 = por %p46, %p47
      %p50 = scmp.ne.s32.totalorder %s35, %s49
      %p51 = scmp.eq.s32.totalorder %s30, 0
      %p52 = por %p50, %p51
      %s54 = sadd.s32 %s53, 1
      %p57 = scmp.eq.s32.totalorder %s24, 1
      %p58 = scmp.ne.s32.totalorder %s53, %s55
      %p59 = scmp.eq.s32.totalorder %s24, 0
      %p60 = por %p58, %p59
      %p61 = scmp.ne.s32.totalorder %s53, %s55
      %p62 = scmp.eq.s32.totalorder %s29, 1
      %p63 = por %p61, %p62
      %p64 = scmp.ne.s32.totalorder %s55, %s56
      %p65 = scmp.eq.s32.totalorder %s29, 0
      %p66 = por %p64, %p65
      %p67 = scmp.ne.s32.totalorder %s55, %s56
      %p68 = scmp.eq.s32.totalorder %s30, 1
      %p69 = por %p67, %p68
      %p71 = scmp.ne.s32.totalorder %s56, %s70
      %p72 = scmp.eq.s32.totalorder %s30, 0
      %p73 = por %p71, %p72
      %s74 = ssub.s32 %s24, %s31
      %p75 = scmp.eq.s32.totalorder %s74, 0
      %s77 = sadd.s32 %s76, 1
      %s78 = scalar_select %p75, %s76, %s77
      %p81 = pneg %p75
      %p82 = scmp.eq.s32.totalorder %s24, 1
      %p83 = por %p81, %p82
      %p84 = scmp.ne.s32.totalorder %s76, %s79
      %p85 = scmp.eq.s32.totalorder %s24, 0
      %p86 = por %p84, %p85
      %p87 = scmp.ne.s32.totalorder %s76, %s79
      %p88 = scmp.eq.s32.totalorder %s29, 1
      %p89 = por %p87, %p88
      %p90 = scmp.ne.s32.totalorder %s79, %s80
      %p91 = scmp.eq.s32.totalorder %s29, 0
      %p92 = por %p90, %p91
      %p93 = scmp.ne.s32.totalorder %s79, %s80
      %p94 = scmp.eq.s32.totalorder %s30, 1
      %p95 = por %p93, %p94
      %p97 = scmp.ne.s32.totalorder %s80, %s96
      %p98 = scmp.eq.s32.totalorder %s30, 0
      %p99 = por %p97, %p98
      %s100 = ssub.s32 %s24, %s31
      %p101 = scmp.eq.s32.totalorder %s100, 0
      %s103 = sadd.s32 %s102, 1
      %s104 = scalar_select %p101, %s102, %s103
      %p107 = pneg %p101
      %p108 = scmp.eq.s32.totalorder %s24, 1
      %p109 = por %p107, %p108
      %p110 = scmp.ne.s32.totalorder %s102, %s105
      %p111 = scmp.eq.s32.totalorder %s24, 0
      %p112 = por %p110, %p111
      %p113 = scmp.ne.s32.totalorder %s102, %s105
      %p114 = scmp.eq.s32.totalorder %s29, 1
      %p115 = por %p113, %p114
      %p116 = scmp.ne.s32.totalorder %s105, %s106
      %p117 = scmp.eq.s32.totalorder %s29, 0
      %p118 = por %p116, %p117
      %p119 = scmp.ne.s32.totalorder %s105, %s106
      %p120 = scmp.eq.s32.totalorder %s30, 1
      %p121 = por %p119, %p120
      %p123 = scmp.ne.s32.totalorder %s106, %s122
      %p124 = scmp.eq.s32.totalorder %s30, 0
      %p125 = por %p123, %p124
      %s126 = ssub.s32 %s24, %s31
      %p127 = scmp.eq.s32.totalorder %s126, 0
      %s129 = sadd.s32 %s128, 1
      %s130 = scalar_select %p127, %s128, %s129
      %p133 = pneg %p127
      %p134 = scmp.eq.s32.totalorder %s24, 1
      %p135 = por %p133, %p134
      %p136 = scmp.ne.s32.totalorder %s128, %s131
      %p137 = scmp.eq.s32.totalorder %s24, 0
      %p138 = por %p136, %p137
      %p139 = scmp.ne.s32.totalorder %s128, %s131
      %p140 = scmp.eq.s32.totalorder %s29, 1
      %p141 = por %p139, %p140
      %p142 = scmp.ne.s32.totalorder %s131, %s132
      %p143 = scmp.eq.s32.totalorder %s29, 0
      %p144 = por %p142, %p143
      %p145 = scmp.ne.s32.totalorder %s131, %s132
      %p146 = scmp.eq.s32.totalorder %s30, 1
      %p147 = por %p145, %p146
      %p149 = scmp.ne.s32.totalorder %s132, %s148
      %p150 = scmp.eq.s32.totalorder %s30, 0
      %p151 = por %p149, %p150
      %s152 = ssub.s32 %s24, %s31
      %p153 = scmp.eq.s32.totalorder %s152, 0
      %s155 = sadd.s32 %s154, 1
      %s156 = scalar_select %p153, %s154, %s155
      %p159 = pneg %p153
      %p160 = scmp.eq.s32.totalorder %s24, 1
      %p161 = por %p159, %p160
      %p162 = scmp.ne.s32.totalorder %s154, %s157
      %p163 = scmp.eq.s32.totalorder %s24, 0
      %p164 = por %p162, %p163
      %p165 = scmp.ne.s32.totalorder %s154, %s157
      %p166 = scmp.eq.s32.totalorder %s29, 1
      %p167 = por %p165, %p166
      %p168 = scmp.ne.s32.totalorder %s157, %s158
      %p169 = scmp.eq.s32.totalorder %s29, 0
      %p170 = por %p168, %p169
      %p171 = scmp.ne.s32.totalorder %s157, %s158
      %p172 = scmp.eq.s32.totalorder %s30, 1
      %p173 = por %p171, %p172
      %p175 = scmp.ne.s32.totalorder %s158, %s174
      %p176 = scmp.eq.s32.totalorder %s30, 0
      %p177 = por %p175, %p176
      %s178 = ssub.s32 %s24, %s31
      %p179 = scmp.eq.s32.totalorder %s178, 0
      %s181 = sadd.s32 %s180, 1
      %s182 = scalar_select %p179, %s180, %s181
      %p185 = pneg %p179
      %p186 = scmp.eq.s32.totalorder %s24, 1
      %p187 = por %p185, %p186
      %p188 = scmp.ne.s32.totalorder %s180, %s183
      %p189 = scmp.eq.s32.totalorder %s24, 0
      %p190 = por %p188, %p189
      %p191 = scmp.ne.s32.totalorder %s180, %s183
      %p192 = scmp.eq.s32.totalorder %s29, 1
      %p193 = por %p191, %p192
      %p194 = scmp.ne.s32.totalorder %s183, %s184
      %p195 = scmp.eq.s32.totalorder %s29, 0
      %p196 = por %p194, %p195
      %p197 = scmp.ne.s32.totalorder %s183, %s184
      %p198 = scmp.eq.s32.totalorder %s30, 1
      %p199 = por %p197, %p198
      %p201 = scmp.ne.s32.totalorder %s184, %s200
      %p202 = scmp.eq.s32.totalorder %s30, 0
      %p203 = por %p201, %p202
      %s204 = ssub.s32 %s24, %s31
      %p205 = scmp.eq.s32.totalorder %s204, 0
      %s207 = sadd.s32 %s206, 1
      %s208 = scalar_select %p205, %s206, %s207
      %p211 = pneg %p205
      %p212 = scmp.eq.s32.totalorder %s24, 1
      %p213 = por %p211, %p212
      %p214 = scmp.ne.s32.totalorder %s206, %s209
      %p215 = scmp.eq.s32.totalorder %s24, 0
      %p216 = por %p214, %p215
      %p217 = scmp.ne.s32.totalorder %s206, %s209
      %p218 = scmp.eq.s32.totalorder %s29, 1
      %p219 = por %p217, %p218
      %p220 = scmp.ne.s32.totalorder %s209, %s210
      %p221 = scmp.eq.s32.totalorder %s29, 0
      %p222 = por %p220, %p221
      %p223 = scmp.ne.s32.totalorder %s209, %s210
      %p224 = scmp.eq.s32.totalorder %s30, 1
      %p225 = por %p223, %p224
      %p227 = scmp.ne.s32.totalorder %s210, %s226
      %p228 = scmp.eq.s32.totalorder %s30, 0
      %p229 = por %p227, %p228
      %s230 = ssub.s32 %s24, %s31
      %p231 = scmp.eq.s32.totalorder %s230, 0
      %s233 = sadd.s32 %s232, 1
      %s234 = scalar_select %p231, %s232, %s233
      %p237 = pneg %p231
      %p238 = scmp.eq.s32.totalorder %s24, 1
      %p239 = por %p237, %p238
      %p240 = scmp.ne.s32.totalorder %s232, %s235
      %p241 = scmp.eq.s32.totalorder %s24, 0
      %p242 = por %p240, %p241
      %p243 = scmp.ne.s32.totalorder %s232, %s235
      %p244 = scmp.eq.s32.totalorder %s29, 1
      %p245 = por %p243, %p244
      %p246 = scmp.ne.s32.totalorder %s235, %s236
      %p247 = scmp.eq.s32.totalorder %s29, 0
      %p248 = por %p246, %p247
      %p249 = scmp.ne.s32.totalorder %s235, %s236
      %p250 = scmp.eq.s32.totalorder %s30, 1
      %p251 = por %p249, %p250
      %p253 = scmp.ne.s32.totalorder %s236, %s252
      %p254 = scmp.eq.s32.totalorder %s30, 0
      %p255 = por %p253, %p254
      %s256 = ssub.s32 %s24, %s31
      %p257 = scmp.eq.s32.totalorder %s256, 0
      %s259 = sadd.s32 %s258, 1
      %s260 = scalar_select %p257, %s258, %s259
      %p263 = pneg %p257
      %p264 = scmp.eq.s32.totalorder %s24, 1
      %p265 = por %p263, %p264
      %p266 = scmp.ne.s32.totalorder %s258, %s261
      %p267 = scmp.eq.s32.totalorder %s24, 0
      %p268 = por %p266, %p267
      %p269 = scmp.ne.s32.totalorder %s258, %s261
      %p270 = scmp.eq.s32.totalorder %s29, 1
      %p271 = por %p269, %p270
      %p272 = scmp.ne.s32.totalorder %s261, %s262
      %p273 = scmp.eq.s32.totalorder %s29, 0
      %p274 = por %p272, %p273
      %p275 = scmp.ne.s32.totalorder %s261, %s262
      %p276 = scmp.eq.s32.totalorder %s30, 1
      %p277 = por %p275, %p276
      %p279 = scmp.ne.s32.totalorder %s262, %s278
      %p280 = scmp.eq.s32.totalorder %s30, 0
      %p281 = por %p279, %p280
      %p282 = scmp.le.s32.totalorder 1, %s24
      %p283 = scmp.lt.s32.totalorder %s24, 3
      %p284 = pnand %p282, %p283
      %p285 = pneg %p284
      // Predicated region
      $region9: #{tpu_custom_call.1} parent=5 // pred_check
        _
      $region10: #{tpu_custom_call.1} parent=5 // pred_check_branch
        %287 = sbr.rel (%p284) target = $region12
      $region11: #{tpu_custom_call.1} parent=5 // pred_region
        %s288 = ssub.s32 %s24, 1
        // Predicated region
        $region13: #{tpu_custom_call.1} parent=11 // pred_check
          %p289 = pneg %p45
        $region14: #{tpu_custom_call.1} parent=11 // pred_check_branch
          %291 = sbr.rel (%p289) target = $region16
        $region15: #{tpu_custom_call.1} parent=11 // pred_region
          %293 = vsyncadd [#allocation3], 0
          %s295 = sshll.u32 %s0, 4
          %s296 = int_to_ptr.hbm [resolvable:$true] %s295
          %s297 = sshll.u32 [#allocation2], 4
          %s298 = int_to_ptr.vmem [resolvable:$true] %s297
          %300 = dma.hbm_to_vmem [thread:$0]  %s296, 128, %s298, [#allocation3]
        $region16: #{tpu_custom_call.1} parent=11 // pred_fallthru
          _
        // Predicated region
        $region17: #{tpu_custom_call.1} parent=11 // pred_check
          %p301 = pneg %p66
        $region18: #{tpu_custom_call.1} parent=11 // pred_check_branch
          %303 = sbr.rel (%p301) target = $region20
        $region19: #{tpu_custom_call.1} parent=11 // pred_region
          %305 = vsyncadd [#allocation6], 0
          %s307 = sshll.u32 %s1, 4
          %s308 = int_to_ptr.hbm [resolvable:$true] %s307
          %s309 = sshll.u32 [#allocation5], 4
          %s310 = int_to_ptr.vmem [resolvable:$true] %s309
          %312 = dma.hbm_to_vmem [thread:$0]  %s308, 128, %s310, [#allocation6]
        $region20: #{tpu_custom_call.1} parent=11 // pred_fallthru
          _
      $region12: #{tpu_custom_call.1} parent=5 // pred_fallthru
        _
      %p313 = scmp.lt.s32.totalorder %s24, 2
      // Predicated region
      $region21: #{tpu_custom_call.1} parent=5 // pred_check
        %p314 = pneg %p313
      $region22: #{tpu_custom_call.1} parent=5 // pred_check_branch
        %316 = sbr.rel (%p314) target = $region24
      $region23: #{tpu_custom_call.1} parent=5 // pred_region
        // Predicated region
        $region25: #{tpu_custom_call.1} parent=23 // pred_check
          %p317 = pneg %p86
        $region26: #{tpu_custom_call.1} parent=23 // pred_check_branch
          %319 = sbr.rel (%p317) target = $region28
        $region27: #{tpu_custom_call.1} parent=23 // pred_region
          %s320 = sand.u32 %s24, 1
          %s321 = scalar_lea.sflag [#allocation3], %s320
          %s322 = sand.u32 %s76, 1
          %s323 = smul.addr %s322, 128
          %s324 = scalar_lea.vmem [#allocation7], %s323
          %326 = vsyncadd %s321, 0
          %s327 = smul.addr %s24, 8
          %s328 = scalar_lea.hbm %s2, %s327
          %s329 = sshll.u32 %s328, 4
          %s330 = int_to_ptr.hbm [resolvable:$true] %s329
          %s331 = sshll.u32 %s324, 4
          %s332 = int_to_ptr.vmem [resolvable:$true] %s331
          %337 = dma.hbm_to_vmem [thread:$0]  %s330, 2048, %s332, %s321, 256, 128, 8
        $region28: #{tpu_custom_call.1} parent=23 // pred_fallthru
          _
        // Predicated region
        $region29: #{tpu_custom_call.1} parent=23 // pred_check
          %p338 = pneg %p112
        $region30: #{tpu_custom_call.1} parent=23 // pred_check_branch
          %340 = sbr.rel (%p338) target = $region32
        $region31: #{tpu_custom_call.1} parent=23 // pred_region
          %s341 = sand.u32 %s24, 1
          %s342 = scalar_lea.sflag [#allocation3], %s341
          %s343 = sand.u32 %s102, 1
          %s344 = smul.addr %s343, 128
          %s345 = scalar_lea.vmem [#allocation8], %s344
          %347 = vsyncadd %s342, 0
          %s348 = smul.addr %s24, 8
          %s349 = scalar_lea.hbm %s3, %s348
          %s350 = sshll.u32 %s349, 4
          %s351 = int_to_ptr.hbm [resolvable:$true] %s350
          %s352 = sshll.u32 %s345, 4
          %s353 = int_to_ptr.vmem [resolvable:$true] %s352
          %358 = dma.hbm_to_vmem [thread:$0]  %s351, 2048, %s353, %s342, 256, 128, 8
        $region32: #{tpu_custom_call.1} parent=23 // pred_fallthru
          _
        // Predicated region
        $region33: #{tpu_custom_call.1} parent=23 // pred_check
          %p359 = pneg %p138
        $region34: #{tpu_custom_call.1} parent=23 // pred_check_branch
          %361 = sbr.rel (%p359) target = $region36
        $region35: #{tpu_custom_call.1} parent=23 // pred_region
          %s362 = sand.u32 %s24, 1
          %s363 = scalar_lea.sflag [#allocation3], %s362
          %s364 = sand.u32 %s128, 1
          %s365 = smul.addr %s364, 128
          %s366 = scalar_lea.vmem [#allocation9], %s365
          %368 = vsyncadd %s363, 0
          %s369 = smul.addr %s24, 8
          %s370 = scalar_lea.hbm %s4, %s369
          %s371 = sshll.u32 %s370, 4
          %s372 = int_to_ptr.hbm [resolvable:$true] %s371
          %s373 = sshll.u32 %s366, 4
          %s374 = int_to_ptr.vmem [resolvable:$true] %s373
          %379 = dma.hbm_to_vmem [thread:$0]  %s372, 2048, %s374, %s363, 256, 128, 8
        $region36: #{tpu_custom_call.1} parent=23 // pred_fallthru
          _
        // Predicated region
        $region37: #{tpu_custom_call.1} parent=23 // pred_check
          %p380 = pneg %p164
        $region38: #{tpu_custom_call.1} parent=23 // pred_check_branch
          %382 = sbr.rel (%p380) target = $region40
        $region39: #{tpu_custom_call.1} parent=23 // pred_region
          %p383 = scmp.lt.s32.totalorder %s24, 1
          %s384 = scalar_select %p383, %s24, 1
          %s385 = scalar_lea.vmem %s5, %s384
        $region40: #{tpu_custom_call.1} parent=23 // pred_fallthru
          _
        // Predicated region
        $region41: #{tpu_custom_call.1} parent=23 // pred_check
          %p386 = pneg %p190
        $region42: #{tpu_custom_call.1} parent=23 // pred_check_branch
          %388 = sbr.rel (%p386) target = $region44
        $region43: #{tpu_custom_call.1} parent=23 // pred_region
          %p389 = scmp.lt.s32.totalorder %s24, 1
          %s390 = scalar_select %p389, %s24, 1
          %s391 = scalar_lea.vmem %s6, %s390
        $region44: #{tpu_custom_call.1} parent=23 // pred_fallthru
          _
        // Predicated region
        $region45: #{tpu_custom_call.1} parent=23 // pred_check
          %p392 = pneg %p216
        $region46: #{tpu_custom_call.1} parent=23 // pred_check_branch
          %394 = sbr.rel (%p392) target = $region48
        $region47: #{tpu_custom_call.1} parent=23 // pred_region
          %p395 = scmp.lt.s32.totalorder %s24, 1
          %s396 = scalar_select %p395, %s24, 1
          %s397 = scalar_lea.vmem %s7, %s396
        $region48: #{tpu_custom_call.1} parent=23 // pred_fallthru
          _
      $region24: #{tpu_custom_call.1} parent=5 // pred_fallthru
        _
      %p398 = scmp.le.s32.totalorder 1, %s24
      %p399 = scmp.lt.s32.totalorder %s24, 3
      %p400 = pnand %p398, %p399
      %p401 = pneg %p400
      // Predicated region
      $region49: #{tpu_custom_call.1} parent=5 // pred_check
        _
      $region50: #{tpu_custom_call.1} parent=5 // pred_check_branch
        %403 = sbr.rel (%p400) target = $region52
      $region51: #{tpu_custom_call.1} parent=5 // pred_region
        %s404 = ssub.s32 %s24, 1
        // Predicated region
        $region53: #{tpu_custom_call.1} parent=51 // pred_check
          %p405 = pneg %p45
        $region54: #{tpu_custom_call.1} parent=51 // pred_check_branch
          %407 = sbr.rel (%p405) target = $region56
        $region55: #{tpu_custom_call.1} parent=51 // pred_region
          %409 = dma.done [#allocation3], 128
        $region56: #{tpu_custom_call.1} parent=51 // pred_fallthru
          _
        // Predicated region
        $region57: #{tpu_custom_call.1} parent=51 // pred_check
          %p410 = pneg %p66
        $region58: #{tpu_custom_call.1} parent=51 // pred_check_branch
          %412 = sbr.rel (%p410) target = $region60
        $region59: #{tpu_custom_call.1} parent=51 // pred_region
          %414 = dma.done [#allocation6], 128
        $region60: #{tpu_custom_call.1} parent=51 // pred_fallthru
          _
        %s415 = sand.u32 %s29, 1
        %s416 = scalar_lea.sflag [#allocation3], %s415
        %s417 = sand.u32 %s79, 1
        %s418 = smul.addr %s417, 128
        %s419 = scalar_lea.vmem [#allocation7], %s418
        // Predicated region
        $region61: #{tpu_custom_call.1} parent=51 // pred_check
          %p420 = pneg %p92
        $region62: #{tpu_custom_call.1} parent=51 // pred_check_branch
          %422 = sbr.rel (%p420) target = $region64
        $region63: #{tpu_custom_call.1} parent=51 // pred_region
          %424 = dma.done %s416, 2048
        $region64: #{tpu_custom_call.1} parent=51 // pred_fallthru
          _
        %s425 = sand.u32 %s29, 1
        %s426 = scalar_lea.sflag [#allocation3], %s425
        %s427 = sand.u32 %s105, 1
        %s428 = smul.addr %s427, 128
        %s429 = scalar_lea.vmem [#allocation8], %s428
        // Predicated region
        $region65: #{tpu_custom_call.1} parent=51 // pred_check
          %p430 = pneg %p118
        $region66: #{tpu_custom_call.1} parent=51 // pred_check_branch
          %432 = sbr.rel (%p430) target = $region68
        $region67: #{tpu_custom_call.1} parent=51 // pred_region
          %434 = dma.done %s426, 2048
        $region68: #{tpu_custom_call.1} parent=51 // pred_fallthru
          _
        %s435 = sand.u32 %s29, 1
        %s436 = scalar_lea.sflag [#allocation3], %s435
        %s437 = sand.u32 %s131, 1
        %s438 = smul.addr %s437, 128
        %s439 = scalar_lea.vmem [#allocation9], %s438
        // Predicated region
        $region69: #{tpu_custom_call.1} parent=51 // pred_check
          %p440 = pneg %p144
        $region70: #{tpu_custom_call.1} parent=51 // pred_check_branch
          %442 = sbr.rel (%p440) target = $region72
        $region71: #{tpu_custom_call.1} parent=51 // pred_region
          %444 = dma.done %s436, 2048
        $region72: #{tpu_custom_call.1} parent=51 // pred_fallthru
          _
        %p445 = pneg %p45
        %p446 = pneg %p42
        %p447 = pneg %p66
        %p448 = pneg %p63
        %s449 = sand.u32 %s29, 1
        %s450 = scalar_lea.sflag [#allocation3], %s449
        %s451 = sand.u32 %s79, 1
        %s452 = smul.addr %s451, 128
        %s453 = scalar_lea.vmem [#allocation7], %s452
        %p454 = pneg %p92
        %p455 = pneg %p89
        %s456 = sand.u32 %s29, 1
        %s457 = scalar_lea.sflag [#allocation3], %s456
        %s458 = sand.u32 %s105, 1
        %s459 = smul.addr %s458, 128
        %s460 = scalar_lea.vmem [#allocation8], %s459
        %p461 = pneg %p118
        %p462 = pneg %p115
        %s463 = sand.u32 %s29, 1
        %s464 = scalar_lea.sflag [#allocation3], %s463
        %s465 = sand.u32 %s131, 1
        %s466 = smul.addr %s465, 128
        %s467 = scalar_lea.vmem [#allocation9], %s466
        %p468 = pneg %p144
        %p469 = pneg %p141
        %p470 = scmp.lt.s32.totalorder %s29, 1
        %s471 = scalar_select %p470, %s29, 1
        %s472 = scalar_lea.vmem %s5, %s471
        %p473 = pneg %p170
        %p474 = pneg %p167
        %p475 = scmp.lt.s32.totalorder %s29, 1
        %s476 = scalar_select %p475, %s29, 1
        %s477 = scalar_lea.vmem %s6, %s476
        %p478 = pneg %p196
        %p479 = pneg %p193
        %p480 = scmp.lt.s32.totalorder %s29, 1
        %s481 = scalar_select %p480, %s29, 1
        %s482 = scalar_lea.vmem %s7, %s481
        %p483 = pneg %p222
        %p484 = pneg %p219
        %p485 = pneg %p248
        %p486 = pneg %p245
        %s487 = sand.u32 %s235, 1
        %s488 = scalar_lea.sflag [#allocation4], %s487
        %s489 = sand.u32 %s235, 1
        %s490 = smul.addr %s489, 8
        %s491 = scalar_lea.vmem [#allocation10], %s490
        %p492 = pneg %p274
        %p493 = pneg %p271
        %s494 = sand.u32 %s261, 1
        %s495 = scalar_lea.sflag [#allocation12], %s494
        %s496 = sand.u32 %s261, 1
        %s497 = scalar_lea.vmem [#allocation11], %s496
        %p498 = scmp.lt.s32.totalorder %s29, 1
        %s499 = scalar_select %p498, %s29, 1
        %s500 = scalar_lea.vmem %s5, %s499
        %p501 = scmp.lt.s32.totalorder %s29, 1
        %s502 = scalar_select %p501, %s29, 1
        %s503 = scalar_lea.vmem %s6, %s502
        %p504 = scmp.lt.s32.totalorder %s29, 1
        %s505 = scalar_select %p504, %s29, 1
        %s506 = scalar_lea.vmem %s7, %s505
        %v507 = vld [vmem:[%s419] sm:$0xff]
        %v508 = vld [vmem:[%s419 + $0x8] sm:$0xff]
        %v509 = vld [vmem:[%s419 + $0x10] sm:$0xff]
        %v510 = vld [vmem:[%s419 + $0x18] sm:$0xff]
        %v511 = vld [vmem:[%s419 + $0x20] sm:$0xff]
        %v512 = vld [vmem:[%s419 + $0x28] sm:$0xff]
        %v513 = vld [vmem:[%s419 + $0x30] sm:$0xff]
        %v514 = vld [vmem:[%s419 + $0x38] sm:$0xff]
        %v515 = vld [vmem:[%s419 + $0x40] sm:$0xff]
        %v516 = vld [vmem:[%s419 + $0x48] sm:$0xff]
        %v517 = vld [vmem:[%s419 + $0x50] sm:$0xff]
        %v518 = vld [vmem:[%s419 + $0x58] sm:$0xff]
        %v519 = vld [vmem:[%s419 + $0x60] sm:$0xff]
        %v520 = vld [vmem:[%s419 + $0x68] sm:$0xff]
        %v521 = vld [vmem:[%s419 + $0x70] sm:$0xff]
        %v522 = vld [vmem:[%s419 + $0x78] sm:$0xff]
        %v523 = vld [vmem:[%s429] sm:$0xff]
        %v524 = vld [vmem:[%s429 + $0x8] sm:$0xff]
        %v525 = vld [vmem:[%s429 + $0x10] sm:$0xff]
        %v526 = vld [vmem:[%s429 + $0x18] sm:$0xff]
        %v527 = vld [vmem:[%s429 + $0x20] sm:$0xff]
        %v528 = vld [vmem:[%s429 + $0x28] sm:$0xff]
        %v529 = vld [vmem:[%s429 + $0x30] sm:$0xff]
        %v530 = vld [vmem:[%s429 + $0x38] sm:$0xff]
        %v531 = vld [vmem:[%s429 + $0x40] sm:$0xff]
        %v532 = vld [vmem:[%s429 + $0x48] sm:$0xff]
        %v533 = vld [vmem:[%s429 + $0x50] sm:$0xff]
        %v534 = vld [vmem:[%s429 + $0x58] sm:$0xff]
        %v535 = vld [vmem:[%s429 + $0x60] sm:$0xff]
        %v536 = vld [vmem:[%s429 + $0x68] sm:$0xff]
        %v537 = vld [vmem:[%s429 + $0x70] sm:$0xff]
        %v538 = vld [vmem:[%s429 + $0x78] sm:$0xff]
        %v539 = vld [vmem:[%s439] sm:$0xff]
        %v540 = vld [vmem:[%s439 + $0x8] sm:$0xff]
        %v541 = vld [vmem:[%s439 + $0x10] sm:$0xff]
        %v542 = vld [vmem:[%s439 + $0x18] sm:$0xff]
        %v543 = vld [vmem:[%s439 + $0x20] sm:$0xff]
        %v544 = vld [vmem:[%s439 + $0x28] sm:$0xff]
        %v545 = vld [vmem:[%s439 + $0x30] sm:$0xff]
        %v546 = vld [vmem:[%s439 + $0x38] sm:$0xff]
        %v547 = vld [vmem:[%s439 + $0x40] sm:$0xff]
        %v548 = vld [vmem:[%s439 + $0x48] sm:$0xff]
        %v549 = vld [vmem:[%s439 + $0x50] sm:$0xff]
        %v550 = vld [vmem:[%s439 + $0x58] sm:$0xff]
        %v551 = vld [vmem:[%s439 + $0x60] sm:$0xff]
        %v552 = vld [vmem:[%s439 + $0x68] sm:$0xff]
        %v553 = vld [vmem:[%s439 + $0x70] sm:$0xff]
        %v554 = vld [vmem:[%s439 + $0x78] sm:$0xff]
        %v555 = vld [vmem:[%s500] sm:$0x1]
        %v556 = vld [vmem:[%s503] sm:$0x1]
        %v557 = vld [vmem:[%s506] sm:$0x1]
        %v558 = vmul.f32 %v523, 1.442695
        %v559 = vpow.pop %v558
        %v560 = vmul.f32 %v524, 1.442695
        %v561 = vpow.pop %v560
        %v562 = vmul.f32 %v525, 1.442695
        %v563 = vpow.pop %v562
        %v564 = vmul.f32 %v526, 1.442695
        %v565 = vpow.pop %v564
        %v566 = vmul.f32 %v527, 1.442695
        %v567 = vpow.pop %v566
        %v568 = vmul.f32 %v528, 1.442695
        %v569 = vpow.pop %v568
        %v570 = vmul.f32 %v529, 1.442695
        %v571 = vpow.pop %v570
        %v572 = vmul.f32 %v530, 1.442695
        %v573 = vpow.pop %v572
        %v574 = vmul.f32 %v531, 1.442695
        %v575 = vpow.pop %v574
        %v576 = vmul.f32 %v532, 1.442695
        %v577 = vpow.pop %v576
        %v578 = vmul.f32 %v533, 1.442695
        %v579 = vpow.pop %v578
        %v580 = vmul.f32 %v534, 1.442695
        %v581 = vpow.pop %v580
        %v582 = vmul.f32 %v535, 1.442695
        %v583 = vpow.pop %v582
        %v584 = vmul.f32 %v536, 1.442695
        %v585 = vpow.pop %v584
        %v586 = vmul.f32 %v537, 1.442695
        %v587 = vpow.pop %v586
        %v588 = vmul.f32 %v538, 1.442695
        %v589 = vpow.pop %v588
        %v590 = vadd.f32 %v559, 1.0
        %v591 = vlog2.pop %v590
        %v592 = vmul.f32 %v591, 0.6931472
        %v593 = vmul.f32 -0.5, %v559
        %v594 = vadd.f32 %v593, 1.0
        %v595 = vmul.f32 %v594, %v559
        %v596 = vand.u32 2147483647, %v559
        %vm597 = vcmp.lt.f32.partialorder %v596, 0.0004427343
        %v598 = vsel %vm597, %v595, %v592
        %v599 = vadd.f32 %v561, 1.0
        %v600 = vlog2.pop %v599
        %v601 = vmul.f32 %v600, 0.6931472
        %v602 = vmul.f32 -0.5, %v561
        %v603 = vadd.f32 %v602, 1.0
        %v604 = vmul.f32 %v603, %v561
        %v605 = vand.u32 2147483647, %v561
        %vm606 = vcmp.lt.f32.partialorder %v605, 0.0004427343
        %v607 = vsel %vm606, %v604, %v601
        %v608 = vadd.f32 %v563, 1.0
        %v609 = vlog2.pop %v608
        %v610 = vmul.f32 %v609, 0.6931472
        %v611 = vmul.f32 -0.5, %v563
        %v612 = vadd.f32 %v611, 1.0
        %v613 = vmul.f32 %v612, %v563
        %v614 = vand.u32 2147483647, %v563
        %vm615 = vcmp.lt.f32.partialorder %v614, 0.0004427343
        %v616 = vsel %vm615, %v613, %v610
        %v617 = vadd.f32 %v565, 1.0
        %v618 = vlog2.pop %v617
        %v619 = vmul.f32 %v618, 0.6931472
        %v620 = vmul.f32 -0.5, %v565
        %v621 = vadd.f32 %v620, 1.0
        %v622 = vmul.f32 %v621, %v565
        %v623 = vand.u32 2147483647, %v565
        %vm624 = vcmp.lt.f32.partialorder %v623, 0.0004427343
        %v625 = vsel %vm624, %v622, %v619
        %v626 = vadd.f32 %v567, 1.0
        %v627 = vlog2.pop %v626
        %v628 = vmul.f32 %v627, 0.6931472
        %v629 = vmul.f32 -0.5, %v567
        %v630 = vadd.f32 %v629, 1.0
        %v631 = vmul.f32 %v630, %v567
        %v632 = vand.u32 2147483647, %v567
        %vm633 = vcmp.lt.f32.partialorder %v632, 0.0004427343
        %v634 = vsel %vm633, %v631, %v628
        %v635 = vadd.f32 %v569, 1.0
        %v636 = vlog2.pop %v635
        %v637 = vmul.f32 %v636, 0.6931472
        %v638 = vmul.f32 -0.5, %v569
        %v639 = vadd.f32 %v638, 1.0
        %v640 = vmul.f32 %v639, %v569
        %v641 = vand.u32 2147483647, %v569
        %vm642 = vcmp.lt.f32.partialorder %v641, 0.0004427343
        %v643 = vsel %vm642, %v640, %v637
        %v644 = vadd.f32 %v571, 1.0
        %v645 = vlog2.pop %v644
        %v646 = vmul.f32 %v645, 0.6931472
        %v647 = vmul.f32 -0.5, %v571
        %v648 = vadd.f32 %v647, 1.0
        %v649 = vmul.f32 %v648, %v571
        %v650 = vand.u32 2147483647, %v571
        %vm651 = vcmp.lt.f32.partialorder %v650, 0.0004427343
        %v652 = vsel %vm651, %v649, %v646
        %v653 = vadd.f32 %v573, 1.0
        %v654 = vlog2.pop %v653
        %v655 = vmul.f32 %v654, 0.6931472
        %v656 = vmul.f32 -0.5, %v573
        %v657 = vadd.f32 %v656, 1.0
        %v658 = vmul.f32 %v657, %v573
        %v659 = vand.u32 2147483647, %v573
        %vm660 = vcmp.lt.f32.partialorder %v659, 0.0004427343
        %v661 = vsel %vm660, %v658, %v655
        %v662 = vadd.f32 %v575, 1.0
        %v663 = vlog2.pop %v662
        %v664 = vmul.f32 %v663, 0.6931472
        %v665 = vmul.f32 -0.5, %v575
        %v666 = vadd.f32 %v665, 1.0
        %v667 = vmul.f32 %v666, %v575
        %v668 = vand.u32 2147483647, %v575
        %vm669 = vcmp.lt.f32.partialorder %v668, 0.0004427343
        %v670 = vsel %vm669, %v667, %v664
        %v671 = vadd.f32 %v577, 1.0
        %v672 = vlog2.pop %v671
        %v673 = vmul.f32 %v672, 0.6931472
        %v674 = vmul.f32 -0.5, %v577
        %v675 = vadd.f32 %v674, 1.0
        %v676 = vmul.f32 %v675, %v577
        %v677 = vand.u32 2147483647, %v577
        %vm678 = vcmp.lt.f32.partialorder %v677, 0.0004427343
        %v679 = vsel %vm678, %v676, %v673
        %v680 = vadd.f32 %v579, 1.0
        %v681 = vlog2.pop %v680
        %v682 = vmul.f32 %v681, 0.6931472
        %v683 = vmul.f32 -0.5, %v579
        %v684 = vadd.f32 %v683, 1.0
        %v685 = vmul.f32 %v684, %v579
        %v686 = vand.u32 2147483647, %v579
        %vm687 = vcmp.lt.f32.partialorder %v686, 0.0004427343
        %v688 = vsel %vm687, %v685, %v682
        %v689 = vadd.f32 %v581, 1.0
        %v690 = vlog2.pop %v689
        %v691 = vmul.f32 %v690, 0.6931472
        %v692 = vmul.f32 -0.5, %v581
        %v693 = vadd.f32 %v692, 1.0
        %v694 = vmul.f32 %v693, %v581
        %v695 = vand.u32 2147483647, %v581
        %vm696 = vcmp.lt.f32.partialorder %v695, 0.0004427343
        %v697 = vsel %vm696, %v694, %v691
        %v698 = vadd.f32 %v583, 1.0
        %v699 = vlog2.pop %v698
        %v700 = vmul.f32 %v699, 0.6931472
        %v701 = vmul.f32 -0.5, %v583
        %v702 = vadd.f32 %v701, 1.0
        %v703 = vmul.f32 %v702, %v583
        %v704 = vand.u32 2147483647, %v583
        %vm705 = vcmp.lt.f32.partialorder %v704, 0.0004427343
        %v706 = vsel %vm705, %v703, %v700
        %v707 = vadd.f32 %v585, 1.0
        %v708 = vlog2.pop %v707
        %v709 = vmul.f32 %v708, 0.6931472
        %v710 = vmul.f32 -0.5, %v585
        %v711 = vadd.f32 %v710, 1.0
        %v712 = vmul.f32 %v711, %v585
        %v713 = vand.u32 2147483647, %v585
        %vm714 = vcmp.lt.f32.partialorder %v713, 0.0004427343
        %v715 = vsel %vm714, %v712, %v709
        %v716 = vadd.f32 %v587, 1.0
        %v717 = vlog2.pop %v716
        %v718 = vmul.f32 %v717, 0.6931472
        %v719 = vmul.f32 -0.5, %v587
        %v720 = vadd.f32 %v719, 1.0
        %v721 = vmul.f32 %v720, %v587
        %v722 = vand.u32 2147483647, %v587
        %vm723 = vcmp.lt.f32.partialorder %v722, 0.0004427343
        %v724 = vsel %vm723, %v721, %v718
        %v725 = vadd.f32 %v589, 1.0
        %v726 = vlog2.pop %v725
        %v727 = vmul.f32 %v726, 0.6931472
        %v728 = vmul.f32 -0.5, %v589
        %v729 = vadd.f32 %v728, 1.0
        %v730 = vmul.f32 %v729, %v589
        %v731 = vand.u32 2147483647, %v589
        %vm732 = vcmp.lt.f32.partialorder %v731, 0.0004427343
        %v733 = vsel %vm732, %v730, %v727
        %v734 = vmul.f32 %v556, 1.442695
        %v735 = vpow.pop %v734
        %v736 = vadd.f32 %v735, 1.0
        %v737 = vlog2.pop %v736
        %v738 = vmul.f32 %v737, 0.6931472
        %v739 = vmul.f32 -0.5, %v735
        %v740 = vadd.f32 %v739, 1.0
        %v741 = vmul.f32 %v740, %v735
        %v742 = vand.u32 2147483647, %v735
        %vm743 = vcmp.lt.f32.partialorder %v742, 0.0004427343
        %v744 = vsel %vm743, %v741, %v738
        %v745 = vmul.f32 %v598, %v539
        %v746 = vmul.f32 %v607, %v540
        %v747 = vmul.f32 %v616, %v541
        %v748 = vmul.f32 %v625, %v542
        %v749 = vmul.f32 %v634, %v543
        %v750 = vmul.f32 %v643, %v544
        %v751 = vmul.f32 %v652, %v545
        %v752 = vmul.f32 %v661, %v546
        %v753 = vmul.f32 %v670, %v547
        %v754 = vmul.f32 %v679, %v548
        %v755 = vmul.f32 %v688, %v549
        %v756 = vmul.f32 %v697, %v550
        %v757 = vmul.f32 %v706, %v551
        %v758 = vmul.f32 %v715, %v552
        %v759 = vmul.f32 %v724, %v553
        %v760 = vmul.f32 %v733, %v554
        %v761 = vadd.f32 %v507, %v745
        %v762 = vadd.f32 %v508, %v746
        %v763 = vadd.f32 %v509, %v747
        %v764 = vadd.f32 %v510, %v748
        %v765 = vadd.f32 %v511, %v749
        %v766 = vadd.f32 %v512, %v750
        %v767 = vadd.f32 %v513, %v751
        %v768 = vadd.f32 %v514, %v752
        %v769 = vadd.f32 %v515, %v753
        %v770 = vadd.f32 %v516, %v754
        %v771 = vadd.f32 %v517, %v755
        %v772 = vadd.f32 %v518, %v756
        %v773 = vadd.f32 %v519, %v757
        %v774 = vadd.f32 %v520, %v758
        %v775 = vadd.f32 %v521, %v759
        %v776 = vadd.f32 %v522, %v760
        %v777 = vmul.f32 %v744, %v557
        %v778 = vadd.f32 %v555, %v777
        %v779 = vld [vmem:[#allocation2] sm:$0xff]
        %v780 = vld [vmem:[#allocation5] sm:$0xff]
        %v781 = vmul.f32 %v779, %v780
        %v783 = vperm.slane %v778, 0
        %785 = vmatpush.msra.mxu0 %v776
        %786 = vmatpush.msra.mxu0 %v775
        %787 = vmatpush.msra.mxu0 %v774
        %788 = vmatpush.msra.mxu0 %v773
        %789 = vmatpush.msra.mxu0 %v772
        %790 = vmatpush.msra.mxu0 %v771
        %791 = vmatpush.msra.mxu0 %v770
        %792 = vmatpush.msra.mxu0 %v769
        %793 = vmatpush.msra.mxu0 %v768
        %794 = vmatpush.msra.mxu0 %v767
        %795 = vmatpush.msra.mxu0 %v766
        %796 = vmatpush.msra.mxu0 %v765
        %797 = vmatpush.msra.mxu0 %v764
        %798 = vmatpush.msra.mxu0 %v763
        %799 = vmatpush.msra.mxu0 %v762
        %800 = vmatpush.msra.mxu0 %v761
        %801 = vmatmul.f32.gmra.mxu0 %v781
        %v802 = vpop.f32.mrf.mxu0
        %v803 = vadd.f32 %v783, %v802
        %804 = vdwg.mxu0
        %805 = vst [vmem:[%s491] sm:$0xff] %v803
        %v806 = vmul.f32 %v598, %v598
        %v807 = vmul.f32 %v607, %v607
        %v808 = vmul.f32 %v616, %v616
        %v809 = vmul.f32 %v625, %v625
        %v810 = vmul.f32 %v634, %v634
        %v811 = vmul.f32 %v643, %v643
        %v812 = vmul.f32 %v652, %v652
        %v813 = vmul.f32 %v661, %v661
        %v814 = vmul.f32 %v670, %v670
        %v815 = vmul.f32 %v679, %v679
        %v816 = vmul.f32 %v688, %v688
        %v817 = vmul.f32 %v697, %v697
        %v818 = vmul.f32 %v706, %v706
        %v819 = vmul.f32 %v715, %v715
        %v820 = vmul.f32 %v724, %v724
        %v821 = vmul.f32 %v733, %v733
        %v822 = vmul.f32 %v507, %v507
        %v823 = vmul.f32 %v508, %v508
        %v824 = vmul.f32 %v509, %v509
        %v825 = vmul.f32 %v510, %v510
        %v826 = vmul.f32 %v511, %v511
        %v827 = vmul.f32 %v512, %v512
        %v828 = vmul.f32 %v513, %v513
        %v829 = vmul.f32 %v514, %v514
        %v830 = vmul.f32 %v515, %v515
        %v831 = vmul.f32 %v516, %v516
        %v832 = vmul.f32 %v517, %v517
        %v833 = vmul.f32 %v518, %v518
        %v834 = vmul.f32 %v519, %v519
        %v835 = vmul.f32 %v520, %v520
        %v836 = vmul.f32 %v521, %v521
        %v837 = vmul.f32 %v522, %v522
        %v838 = vadd.f32 %v806, %v822
        %v839 = vadd.f32 %v807, %v823
        %v840 = vadd.f32 %v808, %v824
        %v841 = vadd.f32 %v809, %v825
        %v842 = vadd.f32 %v810, %v826
        %v843 = vadd.f32 %v811, %v827
        %v844 = vadd.f32 %v812, %v828
        %v845 = vadd.f32 %v813, %v829
        %v846 = vadd.f32 %v814, %v830
        %v847 = vadd.f32 %v815, %v831
        %v848 = vadd.f32 %v816, %v832
        %v849 = vadd.f32 %v817, %v833
        %v850 = vadd.f32 %v818, %v834
        %v851 = vadd.f32 %v819, %v835
        %v852 = vadd.f32 %v820, %v836
        %v853 = vadd.f32 %v821, %v837
        %v854 = vmul.f32 %v838, 0.5
        %v855 = vmul.f32 %v839, 0.5
        %v856 = vmul.f32 %v840, 0.5
        %v857 = vmul.f32 %v841, 0.5
        %v858 = vmul.f32 %v842, 0.5
        %v859 = vmul.f32 %v843, 0.5
        %v860 = vmul.f32 %v844, 0.5
        %v861 = vmul.f32 %v845, 0.5
        %v862 = vmul.f32 %v846, 0.5
        %v863 = vmul.f32 %v847, 0.5
        %v864 = vmul.f32 %v848, 0.5
        %v865 = vmul.f32 %v849, 0.5
        %v866 = vmul.f32 %v850, 0.5
        %v867 = vmul.f32 %v851, 0.5
        %v868 = vmul.f32 %v852, 0.5
        %v869 = vmul.f32 %v853, 0.5
        %v870 = vlog2.pop %v598
        %v871 = vmul.f32 %v870, 0.6931472
        %v872 = vlog2.pop %v607
        %v873 = vmul.f32 %v872, 0.6931472
        %v874 = vlog2.pop %v616
        %v875 = vmul.f32 %v874, 0.6931472
        %v876 = vlog2.pop %v625
        %v877 = vmul.f32 %v876, 0.6931472
        %v878 = vlog2.pop %v634
        %v879 = vmul.f32 %v878, 0.6931472
        %v880 = vlog2.pop %v643
        %v881 = vmul.f32 %v880, 0.6931472
        %v882 = vlog2.pop %v652
        %v883 = vmul.f32 %v882, 0.6931472
        %v884 = vlog2.pop %v661
        %v885 = vmul.f32 %v884, 0.6931472
        %v886 = vlog2.pop %v670
        %v887 = vmul.f32 %v886, 0.6931472
        %v888 = vlog2.pop %v679
        %v889 = vmul.f32 %v888, 0.6931472
        %v890 = vlog2.pop %v688
        %v891 = vmul.f32 %v890, 0.6931472
        %v892 = vlog2.pop %v697
        %v893 = vmul.f32 %v892, 0.6931472
        %v894 = vlog2.pop %v706
        %v895 = vmul.f32 %v894, 0.6931472
        %v896 = vlog2.pop %v715
        %v897 = vmul.f32 %v896, 0.6931472
        %v898 = vlog2.pop %v724
        %v899 = vmul.f32 %v898, 0.6931472
        %v900 = vlog2.pop %v733
        %v901 = vmul.f32 %v900, 0.6931472
        %v902 = vsub.f32 %v854, %v871
        %v903 = vsub.f32 %v855, %v873
        %v904 = vsub.f32 %v856, %v875
        %v905 = vsub.f32 %v857, %v877
        %v906 = vsub.f32 %v858, %v879
        %v907 = vsub.f32 %v859, %v881
        %v908 = vsub.f32 %v860, %v883
        %v909 = vsub.f32 %v861, %v885
        %v910 = vsub.f32 %v862, %v887
        %v911 = vsub.f32 %v863, %v889
        %v912 = vsub.f32 %v864, %v891
        %v913 = vsub.f32 %v865, %v893
        %v914 = vsub.f32 %v866, %v895
        %v915 = vsub.f32 %v867, %v897
        %v916 = vsub.f32 %v868, %v899
        %v917 = vsub.f32 %v869, %v901
        %v918 = vadd.f32 %v902, %v903
        %v919 = vadd.f32 %v918, %v904
        %v920 = vadd.f32 %v919, %v905
        %v921 = vadd.f32 %v920, %v906
        %v922 = vadd.f32 %v921, %v907
        %v923 = vadd.f32 %v922, %v908
        %v924 = vadd.f32 %v923, %v909
        %v925 = vadd.f32 %v924, %v910
        %v926 = vadd.f32 %v925, %v911
        %v927 = vadd.f32 %v926, %v912
        %v928 = vadd.f32 %v927, %v913
        %v929 = vadd.f32 %v928, %v914
        %v930 = vadd.f32 %v929, %v915
        %v931 = vadd.f32 %v930, %v916
        %v932 = vadd.f32 %v931, %v917
        %933 = vadd.xlane.f32.xlu0 %v932
        %v934 = vpop.xlane.xlu0 %933
        %v935 = vrot.slane %v934, 4
        %v936 = vadd.f32 %v934, %v935
        %v937 = vrot.slane %v936, 2
        %v938 = vadd.f32 %v936, %v937
        %v939 = vrot.slane %v938, 1
        %v940 = vadd.f32 %v938, %v939
        %s941 = vtos %v940
        %v942 = vmul.f32 %v744, %v744
        %v943 = vmul.f32 %v555, %v555
        %v944 = vadd.f32 %v942, %v943
        %v945 = vmul.f32 %v944, 0.5
        %v946 = vlog2.pop %v744
        %v947 = vmul.f32 %v946, 0.6931472
        %v948 = vsub.f32 %v945, %v947
        %vm949 = vcmask 1040384
        %v950 = vsel %vm949, %v948, 0.0
        %951 = vadd.xlane.f32.xlu0 %v950
        %v952 = vpop.xlane.xlu0 %951
        %v953 = vrot.slane %v952, 4
        %v954 = vadd.f32 %v952, %v953
        %v955 = vrot.slane %v954, 2
        %v956 = vadd.f32 %v954, %v955
        %v957 = vrot.slane %v956, 1
        %v958 = vadd.f32 %v956, %v957
        %s959 = vtos %v958
        %s960 = sadd.f32 %s941, %s959
        %s961 = ssub.f32 %s960, 8256.0
        %v962 = vstv %s961
        %963 = vst [vmem:[%s497] sm:$0x1] %v962
        %s964 = sand.u32 %s235, 1
        %s965 = scalar_lea.sflag [#allocation4], %s964
        %s966 = sand.u32 %s235, 1
        %s967 = smul.addr %s966, 8
        %s968 = scalar_lea.vmem [#allocation10], %s967
        %s969 = sand.u32 %s261, 1
        %s970 = scalar_lea.sflag [#allocation12], %s969
        %s971 = sand.u32 %s261, 1
        %s972 = scalar_lea.vmem [#allocation11], %s971
        // Predicated region
        $region73: #{tpu_custom_call.1} parent=51 // pred_check
          %p973 = pneg %p245
        $region74: #{tpu_custom_call.1} parent=51 // pred_check_branch
          %975 = sbr.rel (%p973) target = $region76
        $region75: #{tpu_custom_call.1} parent=51 // pred_region
          %977 = vsyncadd %s965, 0
          %s978 = smul.addr %s29, 8
          %s979 = scalar_lea.hbm %s8, %s978
          %s981 = sshll.u32 %s968, 4
          %s982 = int_to_ptr.vmem [resolvable:$true] %s981
          %s983 = sshll.u32 %s979, 4
          %s984 = int_to_ptr.hbm [resolvable:$true] %s983
          %986 = dma.vmem_to_hbm [thread:$0]  %s982, 128, %s984, %s965
        $region76: #{tpu_custom_call.1} parent=51 // pred_fallthru
          _
        // Predicated region
        $region77: #{tpu_custom_call.1} parent=51 // pred_check
          %p987 = pneg %p271
        $region78: #{tpu_custom_call.1} parent=51 // pred_check_branch
          %989 = sbr.rel (%p987) target = $region80
        $region79: #{tpu_custom_call.1} parent=51 // pred_region
          %991 = vsyncadd %s970, 0
          %s992 = scalar_lea.hbm %s9, %s29
          %s994 = sshll.u32 %s972, 4
          %s995 = int_to_ptr.vmem [resolvable:$true] %s994
          %s996 = sshll.u32 %s992, 4
          %s997 = int_to_ptr.hbm [resolvable:$true] %s996
          %999 = dma.vmem_to_hbm [thread:$0]  %s995, 16, %s997, %s970
        $region80: #{tpu_custom_call.1} parent=51 // pred_fallthru
          _
      $region52: #{tpu_custom_call.1} parent=5 // pred_fallthru
        _
      %p1000 = scmp.le.s32.totalorder 2, %s24
      // Predicated region
      $region81: #{tpu_custom_call.1} parent=5 // pred_check
        %p1001 = pneg %p1000
      $region82: #{tpu_custom_call.1} parent=5 // pred_check_branch
        %1003 = sbr.rel (%p1001) target = $region84
      $region83: #{tpu_custom_call.1} parent=5 // pred_region
        %s1004 = ssub.s32 %s24, 2
        // Predicated region
        $region85: #{tpu_custom_call.1} parent=83 // pred_check
          %p1005 = pneg %p251
        $region86: #{tpu_custom_call.1} parent=83 // pred_check_branch
          %1007 = sbr.rel (%p1005) target = $region88
        $region87: #{tpu_custom_call.1} parent=83 // pred_region
          %s1008 = sand.u32 %s236, 1
          %s1009 = scalar_lea.sflag [#allocation4], %s1008
          %s1010 = sand.u32 %s236, 1
          %s1011 = smul.addr %s1010, 8
          %s1012 = scalar_lea.vmem [#allocation10], %s1011
          %1014 = dma.done %s1009, 128
        $region88: #{tpu_custom_call.1} parent=83 // pred_fallthru
          _
        // Predicated region
        $region89: #{tpu_custom_call.1} parent=83 // pred_check
          %p1015 = pneg %p277
        $region90: #{tpu_custom_call.1} parent=83 // pred_check_branch
          %1017 = sbr.rel (%p1015) target = $region92
        $region91: #{tpu_custom_call.1} parent=83 // pred_region
          %s1018 = sand.u32 %s262, 1
          %s1019 = scalar_lea.sflag [#allocation12], %s1018
          %s1020 = sand.u32 %s262, 1
          %s1021 = scalar_lea.vmem [#allocation11], %s1020
          %1023 = dma.done %s1019, 16
        $region92: #{tpu_custom_call.1} parent=83 // pred_fallthru
          _
      $region84: #{tpu_custom_call.1} parent=5 // pred_fallthru
        _
    $region6: #{tpu_custom_call.1} parent=1 // loop_footer
      %s28 = sadd.s32 1, %s24
    $region7: #{tpu_custom_call.1} parent=1 // loop_footer_branch
      %23 = sbr.rel target = $region3
    $region8: #{tpu_custom_call.1} parent=1 // loop_exit
      _
    %1024 = vsyncpa [#allocation3], 1
    %s1025 = scalar_lea.sflag [#allocation3], 1
    %1026 = vsyncpa %s1025, 1
    %1027 = vsyncpa [#allocation6], 1
    %1028 = vsyncpa [#allocation4], 1
    %s1029 = scalar_lea.sflag [#allocation4], 1
    %1030 = vsyncpa %s1029, 1
    %1031 = vsyncpa [#allocation12], 1
    %s1032 = scalar_lea.sflag [#allocation12], 1
    %1033 = vsyncpa %s1032, 1

</llo_original>
